<compile_context>
chip_gen: v7x
topology: tpu7x:2x2x1
jax: 0.10.0
libtpu: 0.0.40
codegen_flags: <defaults>
</compile_context>

<pallas_src>
import functools

import jax
import jax.numpy as jnp
import numpy as np
from jax import lax
from jax.experimental import pallas as pl
from jax.experimental.pallas import tpu as pltpu


# ----------------------------- Pallas kernels ------------------------------ #

def _matmul_stats_kernel(a_ref, w_ref, o_ref, stats_ref, acc_ref):
    """GEMM tile with fused BN partial statistics.

    a_ref: (tm, tk) bf16 patches, w_ref: (tk, tn) bf16 weights,
    o_ref: (tm, tn) f32 conv tile, stats_ref: (8, tn) f32 per-tile stats
    (row 0 = per-channel sum, row 1 = per-channel sum of squares),
    acc_ref: (tm, tn) f32 VMEM accumulator over the K grid axis.
    """
    k = pl.program_id(2)

    @pl.when(k == 0)
    def _():
        acc_ref[...] = jnp.zeros_like(acc_ref)

    acc_ref[...] += jnp.dot(a_ref[...], w_ref[...],
                            preferred_element_type=jnp.float32)

    @pl.when(k == pl.num_programs(2) - 1)
    def _():
        c = acc_ref[...]
        o_ref[...] = c
        stats_ref[0:1, :] = jnp.sum(c, axis=0, keepdims=True)
        stats_ref[1:2, :] = jnp.sum(c * c, axis=0, keepdims=True)
        # Rows 2..7 of the stats block stay unwritten; kernel 2 masks them out.


def _bn_relu_kernel(x_ref, stats_ref, gamma_ref, beta_ref, o_ref, *, m_true, eps):
    """Fused cross-tile stats reduction + BN(affine) + ReLU (in place via alias).

    x_ref: (tm2, OC_pad) conv rows, stats_ref: (nm*8, OC_pad) partial stats,
    gamma/beta: (1, OC_pad).  m_true / eps are static Python constants.
    """
    st = stats_ref[...]
    row = lax.broadcasted_iota(jnp.int32, st.shape, 0) % 8
    ch_sum = jnp.sum(jnp.where(row == 0, st, 0.0), axis=0, keepdims=True)
    ch_sq = jnp.sum(jnp.where(row == 1, st, 0.0), axis=0, keepdims=True)
    mean = ch_sum * (1.0 / m_true)
    var = jnp.maximum(ch_sq * (1.0 / m_true) - mean * mean, 0.0)  # biased var
    inv_std = lax.rsqrt(var + eps)
    scale = gamma_ref[...] * inv_std
    shift = beta_ref[...] - mean * scale
    o_ref[...] = jnp.maximum(x_ref[...] * scale + shift, 0.0)


# ------------------------------ host wrappers ------------------------------ #

def _round_up(v, mult):
    return ((v + mult - 1) // mult) * mult


def _im2col(x, kh, kw, stride):
    """x: [N, C, H, W] -> patches [N*OH*OW, C*KH*KW] (c-major, then kh, kw)."""
    n, c, h, w = x.shape
    oh = (h - kh) // stride + 1
    ow = (w - kw) // stride + 1
    slices = []
    for i in range(kh):
        for j in range(kw):
            slices.append(
                x[:, :, i:i + (oh - 1) * stride + 1:stride,
                        j:j + (ow - 1) * stride + 1:stride])       # [N, C, OH, OW]
    pat = jnp.stack(slices, axis=2)                                # [N, C, KH*KW, OH, OW]
    pat = pat.reshape(n, c * kh * kw, oh, ow)                      # matches OIHW flatten
    pat = pat.transpose(0, 2, 3, 1).reshape(n * oh * ow, c * kh * kw)
    return pat, oh, ow


def conv2d_bn_relu(x, weight, gamma, beta, *, stride=1, eps=1e-5, tm=256):
    """x: [N, C, H, W] f32, weight: [OC, C, KH, KW] f32 -> NCHW f32 output."""
    n, c, h, w = x.shape
    oc, _, kh, kw = weight.shape

    # bf16 operands for the MXU (f32 accumulation inside the kernel).
    x_bf = x.astype(jnp.bfloat16)
    w_bf = weight.astype(jnp.bfloat16)

    # TODO(synk): implicit GEMM — extract patches inside kernel 1 instead of
    # materializing the im2col array through HBM.
    patches, oh, ow = _im2col(x_bf, kh, kw, stride)                # [M, K] bf16
    m, k = patches.shape

    # ---------------------------- tile plan --------------------------------
    # OC tile: 256-wide feeds the 2x256x256 MXUs on v6e/v7x; 128 is the floor.
    if oc <= 256:
        oc_pad = _round_up(oc, 128)
        tn = oc_pad
    else:
        oc_pad = _round_up(oc, 256)
        tn = 256
    nn = oc_pad // tn

    # K tile: single tile up to 512, otherwise 512-deep reduction steps on the
    # last ("arbitrary") grid axis with a VMEM accumulator.
    if k <= 512:
        k_pad = _round_up(k, 128)
        tk = k_pad
    else:
        tk = 512
        k_pad = _round_up(k, tk)
    nk = k_pad // tk

    # Kernel-2 rows-per-tile: big (pure mem-bound elementwise) but a multiple
    # of tm so both kernels share one padded M.  For the demo this also keeps
    # kernel 1 at >= 2 M-tiles (megacore friendly on v7x).
    tm2 = tm * max(1, min(1024 // tm, int(pl.cdiv(m, tm))))
    m_pad = _round_up(m, tm2)
    nm = m_pad // tm
    nm2 = m_pad // tm2

    patches_p = jnp.pad(patches, ((0, m_pad - m), (0, k_pad - k)))     # bf16
    w2 = w_bf.reshape(oc, c * kh * kw).T                               # [K, OC]
    w2_p = jnp.pad(w2, ((0, k_pad - k), (0, oc_pad - oc)))             # bf16

    cost = pl.CostEstimate(
        flops=2 * m_pad * k_pad * oc_pad,
        transcendentals=0,
        bytes_accessed=2 * (m_pad * k_pad + k_pad * oc_pad)
                       + 4 * (m_pad * oc_pad + nm * 8 * oc_pad))

    # ---- kernel 1: tiled GEMM (M x OC x K grid) + per-tile BN statistics ----
    conv_p, stats = pl.pallas_call(
        _matmul_stats_kernel,
        out_shape=(jax.ShapeDtypeStruct((m_pad, oc_pad), jnp.float32),
                   jax.ShapeDtypeStruct((nm * 8, oc_pad), jnp.float32)),
        grid_spec=pltpu.PrefetchScalarGridSpec(
            num_scalar_prefetch=0,
            grid=(nm, nn, nk),
            in_specs=[
                pl.BlockSpec((tm, tk), lambda i, j, kk: (i, kk)),
                # TODO(synk): pipeline_mode=pl.Buffered(1) for this
                # grid-invariant weight block once verified on target jaxlib.
                pl.BlockSpec((tk, tn), lambda i, j, kk: (kk, j)),
            ],
            out_specs=[
                pl.BlockSpec((tm, tn), lambda i, j, kk: (i, j)),
                pl.BlockSpec((8, tn), lambda i, j, kk: (i, j)),
            ],
            scratch_shapes=[pltpu.VMEM((tm, tn), jnp.float32)]),
        compiler_params=pltpu.CompilerParams(
            dimension_semantics=("parallel", "parallel", "arbitrary")),
        cost_estimate=cost,
    )(patches_p, w2_p)

    # ---- kernel 2: fused stats reduction + BN + ReLU, in place -------------
    gamma_p = jnp.pad(gamma, (0, oc_pad - oc)).reshape(1, oc_pad)
    beta_p = jnp.pad(beta, (0, oc_pad - oc)).reshape(1, oc_pad)

    kernel2 = functools.partial(_bn_relu_kernel, m_true=float(m), eps=float(eps))
    out_p = pl.pallas_call(
        kernel2,
        out_shape=jax.ShapeDtypeStruct((m_pad, oc_pad), jnp.float32),
        grid_spec=pltpu.PrefetchScalarGridSpec(
            num_scalar_prefetch=0,
            grid=(nm2,),
            in_specs=[
                pl.BlockSpec((tm2, oc_pad), lambda i: (i, 0)),
                pl.BlockSpec((nm * 8, oc_pad), lambda i: (0, 0)),
                pl.BlockSpec((1, oc_pad), lambda i: (0, 0)),
                pl.BlockSpec((1, oc_pad), lambda i: (0, 0)),
            ],
            out_specs=pl.BlockSpec((tm2, oc_pad), lambda i: (i, 0))),
        compiler_params=pltpu.CompilerParams(
            dimension_semantics=("parallel",)),
        input_output_aliases={0: 0},     # normalize + ReLU in place over conv_p
    )(conv_p, stats, gamma_p, beta_p)

    out = out_p[:m, :oc].reshape(n, oh, ow, oc).transpose(0, 3, 1, 2)  # -> NCHW
    # TODO(synk): keep NHWC end-to-end (or emit NCHW from kernel 2) to avoid
    # this extra output-sized HBM pass.
    return out


# --------------------------------- reference -------------------------------- #

def _reference(x, weight, gamma, beta, *, stride=1, eps=1e-5):
    conv = lax.conv_general_dilated(
        x, weight, window_strides=(stride, stride), padding="VALID",
        dimension_numbers=("NCHW", "OIHW", "NCHW"))
    mean = jnp.mean(conv, axis=(0, 2, 3), keepdims=True)
    var = jnp.mean((conv - mean) ** 2, axis=(0, 2, 3), keepdims=True)  # biased
    y = (conv - mean) * lax.rsqrt(var + eps)
    y = y * gamma.reshape(1, -1, 1, 1) + beta.reshape(1, -1, 1, 1)
    return jnp.maximum(y, 0.0)


# ----------------------------------- main ----------------------------------- #

if __name__ == "__main__":
    key = jax.random.PRNGKey(0)
    kx, kw_ = jax.random.split(key)

    # Module config: Conv2d(in_channels=4, out_channels=8, kernel_size=3,
    #                       stride=1, relu=True, bn=True)  -> conv has no bias.
    N, C, H, W = 2, 4, 16, 16
    OC, KH, KW, STRIDE = 8, 3, 3, 1

    x = jax.random.normal(kx, (N, C, H, W), dtype=jnp.float32)

    # xavier_uniform init for the conv weight (deterministic).
    fan_in = C * KH * KW
    fan_out = OC * KH * KW
    limit = float(np.sqrt(6.0 / (fan_in + fan_out)))
    weight = jax.random.uniform(kw_, (OC, C, KH, KW),
                                minval=-limit, maxval=limit, dtype=jnp.float32)

    # BN params per init_bn: weight (gamma) = 1, bias (beta) = 0.
    gamma = jnp.ones((OC,), jnp.float32)
    beta = jnp.zeros((OC,), jnp.float32)

    out = conv2d_bn_relu(x, weight, gamma, beta, stride=STRIDE, tm=256)
    out = jax.block_until_ready(out)

    ref = _reference(x, weight, gamma, beta, stride=STRIDE)
    # bf16 MXU operands (f32 accumulation): tolerance reflects that choice.
    np.testing.assert_allclose(np.asarray(out), np.asarray(ref),
                               rtol=2e-2, atol=2e-2)

    print("KERNEL_OK")
</pallas_src>

<mosaic_0001>
module attributes {stable_mosaic.version = 11 : i64} {
  func.func @_matmul_stats_kernel(%arg0: i32, %arg1: i32, %arg2: i32, %arg3: memref<256x128xbf16, #tpu.memory_space<vmem>>, %arg4: memref<128x128xbf16, #tpu.memory_space<vmem>>, %arg5: memref<256x128xf32, #tpu.memory_space<vmem>>, %arg6: memref<8x128xf32, #tpu.memory_space<vmem>>, %arg7: memref<256x128xf32, #tpu.memory_space<vmem>>) attributes {dimension_semantics = [#tpu.dimension_semantics<parallel>, #tpu.dimension_semantics<parallel>, #tpu.dimension_semantics<arbitrary>], iteration_bounds = array<i64: 2, 1, 1>, scalar_prefetch = 0 : i64, scratch_operands = 1 : i64, tpu.core_type = #tpu.core_type<tc>, window_params = [{transform_indices = @transform_0, window_bounds = array<i64: 256, 128>}, {transform_indices = @transform_1, window_bounds = array<i64: 128, 128>}, {transform_indices = @transform_2, window_bounds = array<i64: 256, 128>}, {transform_indices = @transform_3, window_bounds = array<i64: 8, 128>}]} {
    %c0_i32 = arith.constant 0 : i32
    %0 = arith.cmpi eq, %arg2, %c0_i32 : i32
    %1 = arith.extui %0 : i1 to i32
    %c0_i32_0 = arith.constant 0 : i32
    %2 = arith.cmpi ne, %1, %c0_i32_0 : i32
    scf.if %2 {
      %cst_10 = arith.constant 0.000000e+00 : f32
      %12 = vector.broadcast %cst_10 : f32 to vector<256x128xf32>
      %c0_11 = arith.constant 0 : index
      %c0_12 = arith.constant 0 : index
      %13 = vector.load %arg7[%c0_11, %c0_12] : memref<256x128xf32, #tpu.memory_space<vmem>>, vector<256x128xf32>
      tpu.vector_store %arg7[%c0_11, %c0_12], %12 {strides = array<i32>} : memref<256x128xf32, #tpu.memory_space<vmem>>, vector<256x128xf32>,
    } else {
    }
    %c0 = arith.constant 0 : index
    %c0_1 = arith.constant 0 : index
    %3 = vector.load %arg7[%c0, %c0_1] : memref<256x128xf32, #tpu.memory_space<vmem>>, vector<256x128xf32>
    %c0_2 = arith.constant 0 : index
    %c0_3 = arith.constant 0 : index
    %4 = vector.load %arg3[%c0_2, %c0_3] : memref<256x128xbf16, #tpu.memory_space<vmem>>, vector<256x128xbf16>
    %c0_4 = arith.constant 0 : index
    %c0_5 = arith.constant 0 : index
    %5 = vector.load %arg4[%c0_4, %c0_5] : memref<128x128xbf16, #tpu.memory_space<vmem>>, vector<128x128xbf16>
    %cst = arith.constant dense<0.000000e+00> : vector<256x128xf32>
    %6 = tpu.matmul %4, %5, %cst {dimension_numbers = #tpu.dot_dimension_numbers<[1], [0], [0], [1], [0, 0, 1, 1], [], []>} : vector<256x128xbf16>, vector<128x128xbf16>, vector<256x128xf32> -> vector<256x128xf32>
    %7 = arith.addf %3, %6 : vector<256x128xf32>
    %c0_6 = arith.constant 0 : index
    %c0_7 = arith.constant 0 : index
    %8 = vector.load %arg7[%c0_6, %c0_7] : memref<256x128xf32, #tpu.memory_space<vmem>>, vector<256x128xf32>
    tpu.vector_store %arg7[%c0_6, %c0_7], %7 {strides = array<i32>} : memref<256x128xf32, #tpu.memory_space<vmem>>, vector<256x128xf32>,
    %c0_i32_8 = arith.constant 0 : i32
    %9 = arith.cmpi eq, %arg2, %c0_i32_8 : i32
    %10 = arith.extui %9 : i1 to i32
    %c0_i32_9 = arith.constant 0 : i32
    %11 = arith.cmpi ne, %10, %c0_i32_9 : i32
    scf.if %11 {
      %c0_10 = arith.constant 0 : index
      %c0_11 = arith.constant 0 : index
      %12 = vector.load %arg7[%c0_10, %c0_11] : memref<256x128xf32, #tpu.memory_space<vmem>>, vector<256x128xf32>
      %c0_12 = arith.constant 0 : index
      %c0_13 = arith.constant 0 : index
      %13 = vector.load %arg5[%c0_12, %c0_13] : memref<256x128xf32, #tpu.memory_space<vmem>>, vector<256x128xf32>
      tpu.vector_store %arg5[%c0_12, %c0_13], %12 {strides = array<i32>} : memref<256x128xf32, #tpu.memory_space<vmem>>, vector<256x128xf32>,
      %cst_14 = arith.constant dense<0.000000e+00> : vector<128xf32>
      %14 = vector.multi_reduction <add>, %12, %cst_14 [0] : vector<256x128xf32> to vector<128xf32>
      %15 = vector.shape_cast %14 : vector<128xf32> to vector<1x128xf32>
      %c0_15 = arith.constant 0 : index
      %c0_16 = arith.constant 0 : index
      %16 = vector.load %arg6[%c0_15, %c0_16] : memref<8x128xf32, #tpu.memory_space<vmem>>, vector<1x128xf32>
      tpu.vector_store %arg6[%c0_15, %c0_16], %15 {strides = array<i32>} : memref<8x128xf32, #tpu.memory_space<vmem>>, vector<1x128xf32>,
      %17 = arith.mulf %12, %12 : vector<256x128xf32>
      %cst_17 = arith.constant dense<0.000000e+00> : vector<128xf32>
      %18 = vector.multi_reduction <add>, %17, %cst_17 [0] : vector<256x128xf32> to vector<128xf32>
      %19 = vector.shape_cast %18 : vector<128xf32> to vector<1x128xf32>
      %c1 = arith.constant 1 : index
      %c0_18 = arith.constant 0 : index
      %20 = vector.load %arg6[%c1, %c0_18] : memref<8x128xf32, #tpu.memory_space<vmem>>, vector<1x128xf32>
      tpu.vector_store %arg6[%c1, %c0_18], %19 {strides = array<i32>} : memref<8x128xf32, #tpu.memory_space<vmem>>, vector<1x128xf32>,
    } else {
    }
    return
  }
  func.func @transform_0(%arg0: i32, %arg1: i32, %arg2: i32) -> (i32, i32) {
    %c0_i32 = arith.constant 0 : i32
    return %arg0, %arg2 : i32, i32
  }
  func.func @transform_1(%arg0: i32, %arg1: i32, %arg2: i32) -> (i32, i32) {
    %c0_i32 = arith.constant 0 : i32
    return %arg2, %arg1 : i32, i32
  }
  func.func @transform_2(%arg0: i32, %arg1: i32, %arg2: i32) -> (i32, i32) {
    %c0_i32 = arith.constant 0 : i32
    return %arg0, %arg1 : i32, i32
  }
  func.func @transform_3(%arg0: i32, %arg1: i32, %arg2: i32) -> (i32, i32) {
    %c0_i32 = arith.constant 0 : i32
    return %arg0, %arg1 : i32, i32
  }
}

</mosaic_0001>

<llo_original>
// kernel: tpu_custom_call.1
$region0: #{tpu_custom_call.1}
  #allocation0 [shape = 'u32[]', space=smem, size = 0x4, offset = 0x4, fixed_abs, tag = 'smem constant byte address 0x4 - core index']
  #allocation1 [shape = 'u32[144,128]{1,0:T(1,128)}', space=vmem, size = 0x12000, scoped, tag = 'internal scratch']
  #allocation2 [shape = 'f32[256,128]{1,0:T(8,128)}', space=vmem, size = 0x20000, scoped, tag = 'scratch operand']
  %s0 = inlined_call_operand.hbm [shape: bf16[512,128], index: 0, kind: input, shape index: {}]
  %s1 = inlined_call_operand.hbm [shape: bf16[128,128], index: 1, kind: input, shape index: {}]
  %s2 = inlined_call_operand.hbm [shape: f32[512,128], index: 2, kind: output, shape index: {0}]
  %s3 = inlined_call_operand.hbm [shape: f32[16,128], index: 3, kind: output, shape index: {1}]
  %4 = xla_tuple %s2, %s3
  %s5 = sld [smem:[#allocation0]]
  $region65: #{tpu_custom_call.1} parent=0
    _
  %s7 = ssub.s32 1, %s5
  %s8 = scalar_select 0, %s7, %s5
  $region1: #{tpu_custom_call.1} parent=0
    #allocation3 [shape = 'u8[131072]{0}', space=vmem, size = 0x20000, scoped, tag = 'input window, operand 0']
    #allocation4 [shape = 's32[2]{0}', space=sflag, size = 0x8, scoped, tag = 'scoped memory for tpu_custom_call.1']
    #allocation5 [shape = 's32[2]{0}', space=sflag, size = 0x8, scoped, tag = 'scoped memory for tpu_custom_call.1']
    #allocation6 [shape = 'u8[32768]{0}', space=vmem, size = 0x8000, scoped, tag = 'input window, operand 1, single buffered']
    #allocation7 [shape = 's32[1]{0}', space=sflag, size = 0x4, scoped, tag = 'scoped memory for tpu_custom_call.1']
    #allocation8 [shape = 'u8[262144]{0}', space=vmem, size = 0x40000, scoped, tag = 'output window, operand 0']
    #allocation9 [shape = 'u8[8192]{0}', space=vmem, size = 0x2000, scoped, tag = 'output window, operand 1']
    #allocation10 [shape = 's32[2]{0}', space=sflag, size = 0x8, scoped, tag = 'scoped memory for tpu_custom_call.1']
    %9 = vsyncpa [#allocation4], 0
    %s10 = scalar_lea.sflag [#allocation4], 1
    %11 = vsyncpa %s10, 0
    %12 = vsyncpa [#allocation7], 0
    %13 = vsyncpa [#allocation5], 0
    %s14 = scalar_lea.sflag [#allocation5], 1
    %15 = vsyncpa %s14, 0
    %16 = vsyncpa [#allocation10], 0
    %s17 = scalar_lea.sflag [#allocation10], 1
    %18 = vsyncpa %s17, 0
    loop: start=0, step=1, limit=4
    $region2: #{tpu_custom_call.1} parent=1 // loop_pre_header
      _
    $region3: #{tpu_custom_call.1} parent=1 // loop_header
      %s20 = sphi 0, %s24
      %p21 = scmp.ge.s32.totalorder %s20, 4
      %s27 = sphi 0, %s46
      %s28 = sphi 0, %s42
      %s29 = sphi 0, %s38
      %s30 = sphi 0, %s27
      %s31 = sphi 0, %s28
      %s32 = sphi 0, %s29
      %s33 = sphi 0, %s30
      %s34 = sphi 0, %s31
      %s35 = sphi 0, %s32
      %s51 = sphi 0, %s53
      %s54 = sphi 0, %s51
      %s55 = sphi 0, %s54
      %s71 = sphi 0, %s55
      %s79 = sphi 0, %s81
      %s82 = sphi 0, %s79
      %s83 = sphi 0, %s82
      %s99 = sphi 0, %s83
      %s107 = sphi 0, %s109
      %s110 = sphi 0, %s107
      %s111 = sphi 0, %s110
      %s127 = sphi 0, %s111
      %s135 = sphi 0, %s137
      %s138 = sphi 0, %s135
      %s139 = sphi 0, %s138
      %s155 = sphi 0, %s139
    $region4: #{tpu_custom_call.1} parent=1 // loop_header_branch
      %23 = sbr.rel (%p21) target = $region8
    $region5: #{tpu_custom_call.1} parent=1 // loop_body
      %s25 = ssub.s32 %s20, 1
      %s26 = ssub.s32 %s20, 2
      %s36 = sadd.s32 1, %s29
      %p37 = scmp.ge.s32.totalorder %s36, 1
      %s38 = scalar_select %p37, 0, %s36
      %s39 = sadd.s32 1, %s28
      %s40 = scalar_select %p37, %s39, %s28
      %p41 = scmp.ge.s32.totalorder %s40, 1
      %s42 = scalar_select %p41, 0, %s40
      %s43 = sadd.s32 1, %s27
      %s44 = scalar_select %p41, %s43, %s27
      %p45 = scmp.ge.s32.totalorder %s44, 2
      %s46 = scalar_select %p45, 0, %s44
      %s47 = ssub.s32 %s27, %s46
      %s48 = ssub.s32 %s29, %s38
      %s49 = sor.u32 %s47, %s48
      %p50 = scmp.eq.s32.totalorder %s49, 0
      %s52 = sadd.s32 %s51, 1
      %s53 = scalar_select %p50, %s51, %s52
      %p56 = pneg %p50
      %p57 = scmp.eq.s32.totalorder %s20, 1
      %p58 = por %p56, %p57
      %p59 = scmp.ne.s32.totalorder %s51, %s54
      %p60 = scmp.eq.s32.totalorder %s20, 0
      %p61 = por %p59, %p60
      %p62 = scmp.ne.s32.totalorder %s51, %s54
      %p63 = scmp.eq.s32.totalorder %s25, 1
      %p64 = por %p62, %p63
      %p65 = scmp.ne.s32.totalorder %s54, %s55
      %p66 = scmp.eq.s32.totalorder %s25, 0
      %p67 = por %p65, %p66
      %p68 = scmp.ne.s32.totalorder %s54, %s55
      %p69 = scmp.eq.s32.totalorder %s26, 1
      %p70 = por %p68, %p69
      %p72 = scmp.ne.s32.totalorder %s55, %s71
      %p73 = scmp.eq.s32.totalorder %s26, 0
      %p74 = por %p72, %p73
      %s75 = ssub.s32 %s29, %s38
      %s76 = ssub.s32 %s28, %s42
      %s77 = sor.u32 %s75, %s76
      %p78 = scmp.eq.s32.totalorder %s77, 0
      %s80 = sadd.s32 %s79, 1
      %s81 = scalar_select %p78, %s79, %s80
      %p84 = pneg %p78
      %p85 = scmp.eq.s32.totalorder %s20, 1
      %p86 = por %p84, %p85
      %p87 = scmp.ne.s32.totalorder %s79, %s82
      %p88 = scmp.eq.s32.totalorder %s20, 0
      %p89 = por %p87, %p88
      %p90 = scmp.ne.s32.totalorder %s79, %s82
      %p91 = scmp.eq.s32.totalorder %s25, 1
      %p92 = por %p90, %p91
      %p93 = scmp.ne.s32.totalorder %s82, %s83
      %p94 = scmp.eq.s32.totalorder %s25, 0
      %p95 = por %p93, %p94
      %p96 = scmp.ne.s32.totalorder %s82, %s83
      %p97 = scmp.eq.s32.totalorder %s26, 1
      %p98 = por %p96, %p97
      %p100 = scmp.ne.s32.totalorder %s83, %s99
      %p101 = scmp.eq.s32.totalorder %s26, 0
      %p102 = por %p100, %p101
      %s103 = ssub.s32 %s27, %s46
      %s104 = ssub.s32 %s28, %s42
      %s105 = sor.u32 %s103, %s104
      %p106 = scmp.eq.s32.totalorder %s105, 0
      %s108 = sadd.s32 %s107, 1
      %s109 = scalar_select %p106, %s107, %s108
      %p112 = pneg %p106
      %p113 = scmp.eq.s32.totalorder %s20, 1
      %p114 = por %p112, %p113
      %p115 = scmp.ne.s32.totalorder %s107, %s110
      %p116 = scmp.eq.s32.totalorder %s20, 0
      %p117 = por %p115, %p116
      %p118 = scmp.ne.s32.totalorder %s107, %s110
      %p119 = scmp.eq.s32.totalorder %s25, 1
      %p120 = por %p118, %p119
      %p121 = scmp.ne.s32.totalorder %s110, %s111
      %p122 = scmp.eq.s32.totalorder %s25, 0
      %p123 = por %p121, %p122
      %p124 = scmp.ne.s32.totalorder %s110, %s111
      %p125 = scmp.eq.s32.totalorder %s26, 1
      %p126 = por %p124, %p125
      %p128 = scmp.ne.s32.totalorder %s111, %s127
      %p129 = scmp.eq.s32.totalorder %s26, 0
      %p130 = por %p128, %p129
      %s131 = ssub.s32 %s27, %s46
      %s132 = ssub.s32 %s28, %s42
      %s133 = sor.u32 %s131, %s132
      %p134 = scmp.eq.s32.totalorder %s133, 0
      %s136 = sadd.s32 %s135, 1
      %s137 = scalar_select %p134, %s135, %s136
      %p140 = pneg %p134
      %p141 = scmp.eq.s32.totalorder %s20, 1
      %p142 = por %p140, %p141
      %p143 = scmp.ne.s32.totalorder %s135, %s138
      %p144 = scmp.eq.s32.totalorder %s20, 0
      %p145 = por %p143, %p144
      %p146 = scmp.ne.s32.totalorder %s135, %s138
      %p147 = scmp.eq.s32.totalorder %s25, 1
      %p148 = por %p146, %p147
      %p149 = scmp.ne.s32.totalorder %s138, %s139
      %p150 = scmp.eq.s32.totalorder %s25, 0
      %p151 = por %p149, %p150
      %p152 = scmp.ne.s32.totalorder %s138, %s139
      %p153 = scmp.eq.s32.totalorder %s26, 1
      %p154 = por %p152, %p153
      %p156 = scmp.ne.s32.totalorder %s139, %s155
      %p157 = scmp.eq.s32.totalorder %s26, 0
      %p158 = por %p156, %p157
      %p159 = scmp.le.s32.totalorder 1, %s20
      %p160 = scmp.lt.s32.totalorder %s20, 3
      %p161 = pnand %p159, %p160
      %p162 = pneg %p161
      // Predicated region
      $region9: #{tpu_custom_call.1} parent=5 // pred_check
        _
      $region10: #{tpu_custom_call.1} parent=5 // pred_check_branch
        %164 = sbr.rel (%p161) target = $region12
      $region11: #{tpu_custom_call.1} parent=5 // pred_region
        %s165 = ssub.s32 %s20, 1
        // Predicated region
        $region13: #{tpu_custom_call.1} parent=11 // pred_check
          %p166 = pneg %p95
        $region14: #{tpu_custom_call.1} parent=11 // pred_check_branch
          %168 = sbr.rel (%p166) target = $region16
        $region15: #{tpu_custom_call.1} parent=11 // pred_region
          %s169 = smul.u32 16, %s32
          %s171 = ssub.s32 1024, 1024
          %172 = vsyncadd [#allocation7], %s171
          %s173 = sadd.s32 %s31, %s169
          %s174 = smul.addr %s173, 64
          %s175 = scalar_lea.hbm %s1, %s174
          %s176 = sshll.u32 [#allocation6], 4
          %s177 = int_to_ptr.vmem [resolvable:$true] %s176
          %182 = dma.hbm_to_vmem [thread:$0]  %s175, 1024, %s177, [#allocation7], 64, 64, 4
        $region16: #{tpu_custom_call.1} parent=11 // pred_fallthru
          _
      $region12: #{tpu_custom_call.1} parent=5 // pred_fallthru
        _
      %p183 = scmp.lt.s32.totalorder %s20, 2
      // Predicated region
      $region17: #{tpu_custom_call.1} parent=5 // pred_check
        %p184 = pneg %p183
      $region18: #{tpu_custom_call.1} parent=5 // pred_check_branch
        %186 = sbr.rel (%p184) target = $region20
      $region19: #{tpu_custom_call.1} parent=5 // pred_region
        // Predicated region
        $region21: #{tpu_custom_call.1} parent=19 // pred_check
          %p187 = pneg %p61
        $region22: #{tpu_custom_call.1} parent=19 // pred_check_branch
          %189 = sbr.rel (%p187) target = $region24
        $region23: #{tpu_custom_call.1} parent=19 // pred_region
          %s190 = sand.u32 %s51, 1
          %s191 = scalar_lea.sflag [#allocation4], %s190
          %s192 = sand.u32 %s51, 1
          %s193 = smul.addr %s192, 128
          %s194 = scalar_lea.vmem [#allocation3], %s193
          %s195 = smul.u32 32, %s27
          %s197 = ssub.s32 2048, 2048
          %198 = vsyncadd %s191, %s197
          %s199 = sadd.s32 %s29, %s195
          %s200 = smul.addr %s199, 64
          %s201 = scalar_lea.hbm %s0, %s200
          %s202 = sshll.u32 %s194, 4
          %s203 = int_to_ptr.vmem [resolvable:$true] %s202
          %208 = dma.hbm_to_vmem [thread:$0]  %s201, 2048, %s203, %s191, 64, 64, 4
        $region24: #{tpu_custom_call.1} parent=19 // pred_fallthru
          _
      $region20: #{tpu_custom_call.1} parent=5 // pred_fallthru
        _
      %p209 = scmp.le.s32.totalorder 1, %s20
      %p210 = scmp.lt.s32.totalorder %s20, 3
      %p211 = pnand %p209, %p210
      %p212 = pneg %p211
      // Predicated region
      $region25: #{tpu_custom_call.1} parent=5 // pred_check
        _
      $region26: #{tpu_custom_call.1} parent=5 // pred_check_branch
        %214 = sbr.rel (%p211) target = $region28
      $region27: #{tpu_custom_call.1} parent=5 // pred_region
        %s215 = ssub.s32 %s20, 1
        %s216 = sand.u32 %s54, 1
        %s217 = scalar_lea.sflag [#allocation4], %s216
        %s218 = sand.u32 %s54, 1
        %s219 = smul.addr %s218, 128
        %s220 = scalar_lea.vmem [#allocation3], %s219
        // Predicated region
        $region29: #{tpu_custom_call.1} parent=27 // pred_check
          %p221 = pneg %p67
        $region30: #{tpu_custom_call.1} parent=27 // pred_check_branch
          %223 = sbr.rel (%p221) target = $region32
        $region31: #{tpu_custom_call.1} parent=27 // pred_region
          %224 = dma.done %s217, 2048
        $region32: #{tpu_custom_call.1} parent=27 // pred_fallthru
          _
        // Predicated region
        $region33: #{tpu_custom_call.1} parent=27 // pred_check
          %p225 = pneg %p95
        $region34: #{tpu_custom_call.1} parent=27 // pred_check_branch
          %227 = sbr.rel (%p225) target = $region36
        $region35: #{tpu_custom_call.1} parent=27 // pred_region
          %228 = dma.done [#allocation7], 1024
        $region36: #{tpu_custom_call.1} parent=27 // pred_fallthru
          _
        %s229 = sand.u32 %s54, 1
        %s230 = scalar_lea.sflag [#allocation4], %s229
        %s231 = sand.u32 %s54, 1
        %s232 = smul.addr %s231, 128
        %s233 = scalar_lea.vmem [#allocation3], %s232
        %p234 = pneg %p67
        %p235 = pneg %p64
        %p236 = pneg %p95
        %p237 = pneg %p92
        %p238 = pneg %p123
        %p239 = pneg %p120
        %s240 = sand.u32 %s110, 1
        %s241 = scalar_lea.sflag [#allocation5], %s240
        %s242 = sand.u32 %s110, 1
        %s243 = smul.addr %s242, 256
        %s244 = scalar_lea.vmem [#allocation8], %s243
        %p245 = pneg %p151
        %p246 = pneg %p148
        %s247 = sand.u32 %s138, 1
        %s248 = scalar_lea.sflag [#allocation10], %s247
        %s249 = sand.u32 %s138, 1
        %s250 = smul.addr %s249, 8
        %s251 = scalar_lea.vmem [#allocation9], %s250
        %s252 = smul.u32 32, %s30
        %s253 = smul.u32 16, %s32
        %s254 = smul.u32 32, %s30
        %p256 = scmp.eq.s32.totalorder %s32, 0
        // Predicated region
        $region37: #{tpu_custom_call.1} parent=27 // pred_check
          %p257 = pneg %p256
        $region38: #{tpu_custom_call.1} parent=27 // pred_check_branch
          %259 = sbr.rel (%p257) target = $region40
        $region39: #{tpu_custom_call.1} parent=27 // pred_region
          %260 = vst [vmem:[#allocation2] sm:$0xff] 0.0
          %261 = vst [vmem:[#allocation2 + $0x8] sm:$0xff] 0.0
          %262 = vst [vmem:[#allocation2 + $0x10] sm:$0xff] 0.0
          %263 = vst [vmem:[#allocation2 + $0x18] sm:$0xff] 0.0
          %264 = vst [vmem:[#allocation2 + $0x20] sm:$0xff] 0.0
          %265 = vst [vmem:[#allocation2 + $0x28] sm:$0xff] 0.0
          %266 = vst [vmem:[#allocation2 + $0x30] sm:$0xff] 0.0
          %267 = vst [vmem:[#allocation2 + $0x38] sm:$0xff] 0.0
          %268 = vst [vmem:[#allocation2 + $0x40] sm:$0xff] 0.0
          %269 = vst [vmem:[#allocation2 + $0x48] sm:$0xff] 0.0
          %270 = vst [vmem:[#allocation2 + $0x50] sm:$0xff] 0.0
          %271 = vst [vmem:[#allocation2 + $0x58] sm:$0xff] 0.0
          %272 = vst [vmem:[#allocation2 + $0x60] sm:$0xff] 0.0
          %273 = vst [vmem:[#allocation2 + $0x68] sm:$0xff] 0.0
          %274 = vst [vmem:[#allocation2 + $0x70] sm:$0xff] 0.0
          %275 = vst [vmem:[#allocation2 + $0x78] sm:$0xff] 0.0
          %276 = vst [vmem:[#allocation2 + $0x80] sm:$0xff] 0.0
          %277 = vst [vmem:[#allocation2 + $0x88] sm:$0xff] 0.0
          %278 = vst [vmem:[#allocation2 + $0x90] sm:$0xff] 0.0
          %279 = vst [vmem:[#allocation2 + $0x98] sm:$0xff] 0.0
          %280 = vst [vmem:[#allocation2 + $0xa0] sm:$0xff] 0.0
          %281 = vst [vmem:[#allocation2 + $0xa8] sm:$0xff] 0.0
          %282 = vst [vmem:[#allocation2 + $0xb0] sm:$0xff] 0.0
          %283 = vst [vmem:[#allocation2 + $0xb8] sm:$0xff] 0.0
          %284 = vst [vmem:[#allocation2 + $0xc0] sm:$0xff] 0.0
          %285 = vst [vmem:[#allocation2 + $0xc8] sm:$0xff] 0.0
          %286 = vst [vmem:[#allocation2 + $0xd0] sm:$0xff] 0.0
          %287 = vst [vmem:[#allocation2 + $0xd8] sm:$0xff] 0.0
          %288 = vst [vmem:[#allocation2 + $0xe0] sm:$0xff] 0.0
          %289 = vst [vmem:[#allocation2 + $0xe8] sm:$0xff] 0.0
          %290 = vst [vmem:[#allocation2 + $0xf0] sm:$0xff] 0.0
          %291 = vst [vmem:[#allocation2 + $0xf8] sm:$0xff] 0.0
        $region40: #{tpu_custom_call.1} parent=27 // pred_fallthru
          _
        %v292 = vld [vmem:[#allocation2] sm:$0xff]
        %v293 = vld [vmem:[#allocation2 + $0x8] sm:$0xff]
        %v294 = vld [vmem:[#allocation2 + $0x10] sm:$0xff]
        %v295 = vld [vmem:[#allocation2 + $0x18] sm:$0xff]
        %v296 = vld [vmem:[#allocation2 + $0x20] sm:$0xff]
        %v297 = vld [vmem:[#allocation2 + $0x28] sm:$0xff]
        %v298 = vld [vmem:[#allocation2 + $0x30] sm:$0xff]
        %v299 = vld [vmem:[#allocation2 + $0x38] sm:$0xff]
        %v300 = vld [vmem:[#allocation2 + $0x40] sm:$0xff]
        %v301 = vld [vmem:[#allocation2 + $0x48] sm:$0xff]
        %v302 = vld [vmem:[#allocation2 + $0x50] sm:$0xff]
        %v303 = vld [vmem:[#allocation2 + $0x58] sm:$0xff]
        %v304 = vld [vmem:[#allocation2 + $0x60] sm:$0xff]
        %v305 = vld [vmem:[#allocation2 + $0x68] sm:$0xff]
        %v306 = vld [vmem:[#allocation2 + $0x70] sm:$0xff]
        %v307 = vld [vmem:[#allocation2 + $0x78] sm:$0xff]
        %v308 = vld [vmem:[#allocation2 + $0x80] sm:$0xff]
        %v309 = vld [vmem:[#allocation2 + $0x88] sm:$0xff]
        %v310 = vld [vmem:[#allocation2 + $0x90] sm:$0xff]
        %v311 = vld [vmem:[#allocation2 + $0x98] sm:$0xff]
        %v312 = vld [vmem:[#allocation2 + $0xa0] sm:$0xff]
        %v313 = vld [vmem:[#allocation2 + $0xa8] sm:$0xff]
        %v314 = vld [vmem:[#allocation2 + $0xb0] sm:$0xff]
        %v315 = vld [vmem:[#allocation2 + $0xb8] sm:$0xff]
        %v316 = vld [vmem:[#allocation2 + $0xc0] sm:$0xff]
        %v317 = vld [vmem:[#allocation2 + $0xc8] sm:$0xff]
        %v318 = vld [vmem:[#allocation2 + $0xd0] sm:$0xff]
        %v319 = vld [vmem:[#allocation2 + $0xd8] sm:$0xff]
        %v320 = vld [vmem:[#allocation2 + $0xe0] sm:$0xff]
        %v321 = vld [vmem:[#allocation2 + $0xe8] sm:$0xff]
        %v322 = vld [vmem:[#allocation2 + $0xf0] sm:$0xff]
        %v323 = vld [vmem:[#allocation2 + $0xf8] sm:$0xff]
        %v324 = vld [vmem:[%s220] sm:$0xf]
        %v325 = vld [vmem:[%s220 + $0x4] sm:$0xf]
        %v326 = vld [vmem:[%s220 + $0x8] sm:$0xf]
        %v327 = vld [vmem:[%s220 + $0xc] sm:$0xf]
        %v328 = vld [vmem:[%s220 + $0x10] sm:$0xf]
        %v329 = vld [vmem:[%s220 + $0x14] sm:$0xf]
        %v330 = vld [vmem:[%s220 + $0x18] sm:$0xf]
        %v331 = vld [vmem:[%s220 + $0x1c] sm:$0xf]
        %v332 = vld [vmem:[%s220 + $0x20] sm:$0xf]
        %v333 = vld [vmem:[%s220 + $0x24] sm:$0xf]
        %v334 = vld [vmem:[%s220 + $0x28] sm:$0xf]
        %v335 = vld [vmem:[%s220 + $0x2c] sm:$0xf]
        %v336 = vld [vmem:[%s220 + $0x30] sm:$0xf]
        %v337 = vld [vmem:[%s220 + $0x34] sm:$0xf]
        %v338 = vld [vmem:[%s220 + $0x38] sm:$0xf]
        %v339 = vld [vmem:[%s220 + $0x3c] sm:$0xf]
        %v340 = vld [vmem:[%s220 + $0x40] sm:$0xf]
        %v341 = vld [vmem:[%s220 + $0x44] sm:$0xf]
        %v342 = vld [vmem:[%s220 + $0x48] sm:$0xf]
        %v343 = vld [vmem:[%s220 + $0x4c] sm:$0xf]
        %v344 = vld [vmem:[%s220 + $0x50] sm:$0xf]
        %v345 = vld [vmem:[%s220 + $0x54] sm:$0xf]
        %v346 = vld [vmem:[%s220 + $0x58] sm:$0xf]
        %v347 = vld [vmem:[%s220 + $0x5c] sm:$0xf]
        %v348 = vld [vmem:[%s220 + $0x60] sm:$0xf]
        %v349 = vld [vmem:[%s220 + $0x64] sm:$0xf]
        %v350 = vld [vmem:[%s220 + $0x68] sm:$0xf]
        %v351 = vld [vmem:[%s220 + $0x6c] sm:$0xf]
        %v352 = vld [vmem:[%s220 + $0x70] sm:$0xf]
        %v353 = vld [vmem:[%s220 + $0x74] sm:$0xf]
        %v354 = vld [vmem:[%s220 + $0x78] sm:$0xf]
        %v355 = vld [vmem:[%s220 + $0x7c] sm:$0xf]
        %v356 = vld [vmem:[#allocation6] sm:$0xf]
        %v357 = vld [vmem:[#allocation6 + $0x4] sm:$0xf]
        %v358 = vld [vmem:[#allocation6 + $0x8] sm:$0xf]
        %v359 = vld [vmem:[#allocation6 + $0xc] sm:$0xf]
        %v360 = vld [vmem:[#allocation6 + $0x10] sm:$0xf]
        %v361 = vld [vmem:[#allocation6 + $0x14] sm:$0xf]
        %v362 = vld [vmem:[#allocation6 + $0x18] sm:$0xf]
        %v363 = vld [vmem:[#allocation6 + $0x1c] sm:$0xf]
        %v364 = vld [vmem:[#allocation6 + $0x20] sm:$0xf]
        %v365 = vld [vmem:[#allocation6 + $0x24] sm:$0xf]
        %v366 = vld [vmem:[#allocation6 + $0x28] sm:$0xf]
        %v367 = vld [vmem:[#allocation6 + $0x2c] sm:$0xf]
        %v368 = vld [vmem:[#allocation6 + $0x30] sm:$0xf]
        %v369 = vld [vmem:[#allocation6 + $0x34] sm:$0xf]
        %v370 = vld [vmem:[#allocation6 + $0x38] sm:$0xf]
        %v371 = vld [vmem:[#allocation6 + $0x3c] sm:$0xf]
        %v404 = vunpack.c.l.b16 %v324
        %v405 = vunpack.c.l.b16 %v325
        %v406 = vunpack.c.l.b16 %v326
        %v407 = vunpack.c.l.b16 %v327
        %v408 = vunpack.c.l.b16 %v328
        %v409 = vunpack.c.l.b16 %v329
        %v410 = vunpack.c.l.b16 %v330
        %v411 = vunpack.c.l.b16 %v331
        %v412 = vunpack.c.l.b16 %v332
        %v413 = vunpack.c.l.b16 %v333
        %v414 = vunpack.c.l.b16 %v334
        %v415 = vunpack.c.l.b16 %v335
        %v416 = vunpack.c.l.b16 %v336
        %v417 = vunpack.c.l.b16 %v337
        %v418 = vunpack.c.l.b16 %v338
        %v419 = vunpack.c.l.b16 %v339
        %v420 = vunpack.c.l.b16 %v340
        %v421 = vunpack.c.l.b16 %v341
        %v422 = vunpack.c.l.b16 %v342
        %v423 = vunpack.c.l.b16 %v343
        %v424 = vunpack.c.l.b16 %v344
        %v425 = vunpack.c.l.b16 %v345
        %v426 = vunpack.c.l.b16 %v346
        %v427 = vunpack.c.l.b16 %v347
        %v428 = vunpack.c.l.b16 %v348
        %v429 = vunpack.c.l.b16 %v349
        %v430 = vunpack.c.l.b16 %v350
        %v431 = vunpack.c.l.b16 %v351
        %v432 = vunpack.c.l.b16 %v352
        %v433 = vunpack.c.l.b16 %v353
        %v434 = vunpack.c.l.b16 %v354
        %v435 = vunpack.c.l.b16 %v355
        %v436 = vpack.c.b16 %v405, %v404
        %v437 = vpack.c.b16 %v407, %v406
        %v438 = vpack.c.b16 %v409, %v408
        %v439 = vpack.c.b16 %v411, %v410
        %v440 = vpack.c.b16 %v413, %v412
        %v441 = vpack.c.b16 %v415, %v414
        %v442 = vpack.c.b16 %v417, %v416
        %v443 = vpack.c.b16 %v419, %v418
        %v444 = vpack.c.b16 %v421, %v420
        %v445 = vpack.c.b16 %v423, %v422
        %v446 = vpack.c.b16 %v425, %v424
        %v447 = vpack.c.b16 %v427, %v426
        %v448 = vpack.c.b16 %v429, %v428
        %v449 = vpack.c.b16 %v431, %v430
        %v450 = vpack.c.b16 %v433, %v432
        %v451 = vpack.c.b16 %v435, %v434
        %v484 = vunpack.c.l.b16 %v356
        %v485 = vunpack.c.l.b16 %v357
        %v486 = vunpack.c.l.b16 %v358
        %v487 = vunpack.c.l.b16 %v359
        %v488 = vunpack.c.l.b16 %v360
        %v489 = vunpack.c.l.b16 %v361
        %v490 = vunpack.c.l.b16 %v362
        %v491 = vunpack.c.l.b16 %v363
        %v492 = vunpack.c.l.b16 %v364
        %v493 = vunpack.c.l.b16 %v365
        %v494 = vunpack.c.l.b16 %v366
        %v495 = vunpack.c.l.b16 %v367
        %v496 = vunpack.c.l.b16 %v368
        %v497 = vunpack.c.l.b16 %v369
        %v498 = vunpack.c.l.b16 %v370
        %v499 = vunpack.c.l.b16 %v371
        %v500 = vpack.c.b16 %v485, %v484
        %v501 = vpack.c.b16 %v487, %v486
        %v502 = vpack.c.b16 %v489, %v488
        %v503 = vpack.c.b16 %v491, %v490
        %v504 = vpack.c.b16 %v493, %v492
        %v505 = vpack.c.b16 %v495, %v494
        %v506 = vpack.c.b16 %v497, %v496
        %v507 = vpack.c.b16 %v499, %v498
        %516 = vmatprep.subr.bf16.mxu0 0
        %517 = vmatpush1.bf16.msra.mxu0 %v500
        %518 = vmatprep.subr.bf16.mxu0 0
        %519 = vmatpush1.bf16.msra.mxu0 %v501
        %520 = vmatprep.subr.bf16.mxu0 0
        %521 = vmatpush1.bf16.msra.mxu0 %v502
        %522 = vmatprep.subr.bf16.mxu0 0
        %523 = vmatpush1.bf16.msra.mxu0 %v503
        %524 = vmatprep.subr.bf16.mxu0 0
        %525 = vmatpush1.bf16.msra.mxu0 %v504
        %526 = vmatprep.subr.bf16.mxu0 0
        %527 = vmatpush1.bf16.msra.mxu0 %v505
        %528 = vmatprep.subr.bf16.mxu0 0
        %529 = vmatpush1.bf16.msra.mxu0 %v506
        %530 = vmatprep.subr.bf16.mxu0 0
        %531 = vmatpush1.bf16.msra.mxu0 %v507
        %532 = vmatprep.subr.bf16.mxu0 0
        %533 = vmatpush1.bf16.msra.mxu0 0
        %534 = vmatprep.subr.bf16.mxu0 0
        %535 = vmatpush1.bf16.msra.mxu0 0
        %536 = vmatprep.subr.bf16.mxu0 0
        %537 = vmatpush1.bf16.msra.mxu0 0
        %538 = vmatprep.subr.bf16.mxu0 0
        %539 = vmatpush1.bf16.msra.mxu0 0
        %540 = vmatprep.subr.bf16.mxu0 0
        %541 = vmatpush1.bf16.msra.mxu0 0
        %542 = vmatprep.subr.bf16.mxu0 0
        %543 = vmatpush1.bf16.msra.mxu0 0
        %544 = vmatprep.subr.bf16.mxu0 0
        %545 = vmatpush1.bf16.msra.mxu0 0
        %546 = vmatprep.subr.bf16.mxu0 0
        %547 = vmatpush1.bf16.msra.mxu0 0
        %548 = vmatprep.mubr.bf16.mxu0 0
        %549 = vmatmul.mubr.bf16.gmra.mrb[0].mxu0 %v436
        %v550 = vpop.f32.mrb[0].mxu0
        %v551 = vadd.f32 0.0, %v550
        %v552 = vpop.f32.mrb[0].mxu0
        %v553 = vpop.f32.mrb[0].mxu0
        %v554 = vadd.f32 0.0, %v553
        %v555 = vpop.f32.mrb[0].mxu0
        %556 = vmatprep.mubr.bf16.mxu0 0
        %557 = vmatmul.mubr.bf16.gmra.mrb[0].mxu0 %v437
        %v558 = vpop.f32.mrb[0].mxu0
        %v559 = vadd.f32 0.0, %v558
        %v560 = vpop.f32.mrb[0].mxu0
        %v561 = vpop.f32.mrb[0].mxu0
        %v562 = vadd.f32 0.0, %v561
        %v563 = vpop.f32.mrb[0].mxu0
        %564 = vmatprep.mubr.bf16.mxu0 0
        %565 = vmatmul.mubr.bf16.gmra.mrb[0].mxu0 %v438
        %v566 = vpop.f32.mrb[0].mxu0
        %v567 = vadd.f32 0.0, %v566
        %v568 = vpop.f32.mrb[0].mxu0
        %v569 = vpop.f32.mrb[0].mxu0
        %v570 = vadd.f32 0.0, %v569
        %v571 = vpop.f32.mrb[0].mxu0
        %572 = vmatprep.mubr.bf16.mxu0 0
        %573 = vmatmul.mubr.bf16.gmra.mrb[0].mxu0 %v439
        %v574 = vpop.f32.mrb[0].mxu0
        %v575 = vadd.f32 0.0, %v574
        %v576 = vpop.f32.mrb[0].mxu0
        %v577 = vpop.f32.mrb[0].mxu0
        %v578 = vadd.f32 0.0, %v577
        %v579 = vpop.f32.mrb[0].mxu0
        %580 = vmatprep.mubr.bf16.mxu0 0
        %581 = vmatmul.mubr.bf16.gmra.mrb[0].mxu0 %v440
        %v582 = vpop.f32.mrb[0].mxu0
        %v583 = vadd.f32 0.0, %v582
        %v584 = vpop.f32.mrb[0].mxu0
        %v585 = vpop.f32.mrb[0].mxu0
        %v586 = vadd.f32 0.0, %v585
        %v587 = vpop.f32.mrb[0].mxu0
        %588 = vmatprep.mubr.bf16.mxu0 0
        %589 = vmatmul.mubr.bf16.gmra.mrb[0].mxu0 %v441
        %v590 = vpop.f32.mrb[0].mxu0
        %v591 = vadd.f32 0.0, %v590
        %v592 = vpop.f32.mrb[0].mxu0
        %v593 = vpop.f32.mrb[0].mxu0
        %v594 = vadd.f32 0.0, %v593
        %v595 = vpop.f32.mrb[0].mxu0
        %596 = vmatprep.mubr.bf16.mxu0 0
        %597 = vmatmul.mubr.bf16.gmra.mrb[0].mxu0 %v442
        %v598 = vpop.f32.mrb[0].mxu0
        %v599 = vadd.f32 0.0, %v598
        %v600 = vpop.f32.mrb[0].mxu0
        %v601 = vpop.f32.mrb[0].mxu0
        %v602 = vadd.f32 0.0, %v601
        %v603 = vpop.f32.mrb[0].mxu0
        %604 = vmatprep.mubr.bf16.mxu0 0
        %605 = vmatmul.mubr.bf16.gmra.mrb[0].mxu0 %v443
        %v606 = vpop.f32.mrb[0].mxu0
        %v607 = vadd.f32 0.0, %v606
        %v608 = vpop.f32.mrb[0].mxu0
        %v609 = vpop.f32.mrb[0].mxu0
        %v610 = vadd.f32 0.0, %v609
        %v611 = vpop.f32.mrb[0].mxu0
        %612 = vmatprep.mubr.bf16.mxu0 0
        %613 = vmatmul.mubr.bf16.gmra.mrb[0].mxu0 %v444
        %v614 = vpop.f32.mrb[0].mxu0
        %v615 = vadd.f32 0.0, %v614
        %v616 = vpop.f32.mrb[0].mxu0
        %v617 = vpop.f32.mrb[0].mxu0
        %v618 = vadd.f32 0.0, %v617
        %v619 = vpop.f32.mrb[0].mxu0
        %620 = vmatprep.mubr.bf16.mxu0 0
        %621 = vmatmul.mubr.bf16.gmra.mrb[0].mxu0 %v445
        %v622 = vpop.f32.mrb[0].mxu0
        %v623 = vadd.f32 0.0, %v622
        %v624 = vpop.f32.mrb[0].mxu0
        %v625 = vpop.f32.mrb[0].mxu0
        %v626 = vadd.f32 0.0, %v625
        %v627 = vpop.f32.mrb[0].mxu0
        %628 = vmatprep.mubr.bf16.mxu0 0
        %629 = vmatmul.mubr.bf16.gmra.mrb[0].mxu0 %v446
        %v630 = vpop.f32.mrb[0].mxu0
        %v631 = vadd.f32 0.0, %v630
        %v632 = vpop.f32.mrb[0].mxu0
        %v633 = vpop.f32.mrb[0].mxu0
        %v634 = vadd.f32 0.0, %v633
        %v635 = vpop.f32.mrb[0].mxu0
        %636 = vmatprep.mubr.bf16.mxu0 0
        %637 = vmatmul.mubr.bf16.gmra.mrb[0].mxu0 %v447
        %v638 = vpop.f32.mrb[0].mxu0
        %v639 = vadd.f32 0.0, %v638
        %v640 = vpop.f32.mrb[0].mxu0
        %v641 = vpop.f32.mrb[0].mxu0
        %v642 = vadd.f32 0.0, %v641
        %v643 = vpop.f32.mrb[0].mxu0
        %644 = vmatprep.mubr.bf16.mxu0 0
        %645 = vmatmul.mubr.bf16.gmra.mrb[0].mxu0 %v448
        %v646 = vpop.f32.mrb[0].mxu0
        %v647 = vadd.f32 0.0, %v646
        %v648 = vpop.f32.mrb[0].mxu0
        %v649 = vpop.f32.mrb[0].mxu0
        %v650 = vadd.f32 0.0, %v649
        %v651 = vpop.f32.mrb[0].mxu0
        %652 = vmatprep.mubr.bf16.mxu0 0
        %653 = vmatmul.mubr.bf16.gmra.mrb[0].mxu0 %v449
        %v654 = vpop.f32.mrb[0].mxu0
        %v655 = vadd.f32 0.0, %v654
        %v656 = vpop.f32.mrb[0].mxu0
        %v657 = vpop.f32.mrb[0].mxu0
        %v658 = vadd.f32 0.0, %v657
        %v659 = vpop.f32.mrb[0].mxu0
        %660 = vmatprep.mubr.bf16.mxu0 0
        %661 = vmatmul.mubr.bf16.gmra.mrb[0].mxu0 %v450
        %v662 = vpop.f32.mrb[0].mxu0
        %v663 = vadd.f32 0.0, %v662
        %v664 = vpop.f32.mrb[0].mxu0
        %v665 = vpop.f32.mrb[0].mxu0
        %v666 = vadd.f32 0.0, %v665
        %v667 = vpop.f32.mrb[0].mxu0
        %668 = vmatprep.mubr.bf16.mxu0 0
        %669 = vmatmul.mubr.bf16.gmra.mrb[0].mxu0 %v451
        %v670 = vpop.f32.mrb[0].mxu0
        %v671 = vadd.f32 0.0, %v670
        %v672 = vpop.f32.mrb[0].mxu0
        %v673 = vpop.f32.mrb[0].mxu0
        %v674 = vadd.f32 0.0, %v673
        %v675 = vpop.f32.mrb[0].mxu0
        %676 = vdwg.mxu0
        %v677 = vadd.f32 %v292, %v551
        %v678 = vadd.f32 %v293, %v554
        %v679 = vadd.f32 %v294, %v559
        %v680 = vadd.f32 %v295, %v562
        %v681 = vadd.f32 %v296, %v567
        %v682 = vadd.f32 %v297, %v570
        %v683 = vadd.f32 %v298, %v575
        %v684 = vadd.f32 %v299, %v578
        %v685 = vadd.f32 %v300, %v583
        %v686 = vadd.f32 %v301, %v586
        %v687 = vadd.f32 %v302, %v591
        %v688 = vadd.f32 %v303, %v594
        %v689 = vadd.f32 %v304, %v599
        %v690 = vadd.f32 %v305, %v602
        %v691 = vadd.f32 %v306, %v607
        %v692 = vadd.f32 %v307, %v610
        %v693 = vadd.f32 %v308, %v615
        %v694 = vadd.f32 %v309, %v618
        %v695 = vadd.f32 %v310, %v623
        %v696 = vadd.f32 %v311, %v626
        %v697 = vadd.f32 %v312, %v631
        %v698 = vadd.f32 %v313, %v634
        %v699 = vadd.f32 %v314, %v639
        %v700 = vadd.f32 %v315, %v642
        %v701 = vadd.f32 %v316, %v647
        %v702 = vadd.f32 %v317, %v650
        %v703 = vadd.f32 %v318, %v655
        %v704 = vadd.f32 %v319, %v658
        %v705 = vadd.f32 %v320, %v663
        %v706 = vadd.f32 %v321, %v666
        %v707 = vadd.f32 %v322, %v671
        %v708 = vadd.f32 %v323, %v674
        %709 = vst [vmem:[#allocation2] sm:$0xff] %v677
        %710 = vst [vmem:[#allocation2 + $0x8] sm:$0xff] %v678
        %711 = vst [vmem:[#allocation2 + $0x10] sm:$0xff] %v679
        %712 = vst [vmem:[#allocation2 + $0x18] sm:$0xff] %v680
        %713 = vst [vmem:[#allocation2 + $0x20] sm:$0xff] %v681
        %714 = vst [vmem:[#allocation2 + $0x28] sm:$0xff] %v682
        %715 = vst [vmem:[#allocation2 + $0x30] sm:$0xff] %v683
        %716 = vst [vmem:[#allocation2 + $0x38] sm:$0xff] %v684
        %717 = vst [vmem:[#allocation2 + $0x40] sm:$0xff] %v685
        %718 = vst [vmem:[#allocation2 + $0x48] sm:$0xff] %v686
        %719 = vst [vmem:[#allocation2 + $0x50] sm:$0xff] %v687
        %720 = vst [vmem:[#allocation2 + $0x58] sm:$0xff] %v688
        %721 = vst [vmem:[#allocation2 + $0x60] sm:$0xff] %v689
        %722 = vst [vmem:[#allocation2 + $0x68] sm:$0xff] %v690
        %723 = vst [vmem:[#allocation2 + $0x70] sm:$0xff] %v691
        %724 = vst [vmem:[#allocation2 + $0x78] sm:$0xff] %v692
        %725 = vst [vmem:[#allocation2 + $0x80] sm:$0xff] %v693
        %726 = vst [vmem:[#allocation2 + $0x88] sm:$0xff] %v694
        %727 = vst [vmem:[#allocation2 + $0x90] sm:$0xff] %v695
        %728 = vst [vmem:[#allocation2 + $0x98] sm:$0xff] %v696
        %729 = vst [vmem:[#allocation2 + $0xa0] sm:$0xff] %v697
        %730 = vst [vmem:[#allocation2 + $0xa8] sm:$0xff] %v698
        %731 = vst [vmem:[#allocation2 + $0xb0] sm:$0xff] %v699
        %732 = vst [vmem:[#allocation2 + $0xb8] sm:$0xff] %v700
        %733 = vst [vmem:[#allocation2 + $0xc0] sm:$0xff] %v701
        %734 = vst [vmem:[#allocation2 + $0xc8] sm:$0xff] %v702
        %735 = vst [vmem:[#allocation2 + $0xd0] sm:$0xff] %v703
        %736 = vst [vmem:[#allocation2 + $0xd8] sm:$0xff] %v704
        %737 = vst [vmem:[#allocation2 + $0xe0] sm:$0xff] %v705
        %738 = vst [vmem:[#allocation2 + $0xe8] sm:$0xff] %v706
        %739 = vst [vmem:[#allocation2 + $0xf0] sm:$0xff] %v707
        %740 = vst [vmem:[#allocation2 + $0xf8] sm:$0xff] %v708
        // Predicated region
        $region41: #{tpu_custom_call.1} parent=27 // pred_check
          %p741 = pneg %p256
        $region42: #{tpu_custom_call.1} parent=27 // pred_check_branch
          %743 = sbr.rel (%p741) target = $region44
        $region43: #{tpu_custom_call.1} parent=27 // pred_region
          %v744 = vld [vmem:[#allocation2] sm:$0xff]
          %v745 = vld [vmem:[#allocation2 + $0x8] sm:$0xff]
          %v746 = vld [vmem:[#allocation2 + $0x10] sm:$0xff]
          %v747 = vld [vmem:[#allocation2 + $0x18] sm:$0xff]
          %v748 = vld [vmem:[#allocation2 + $0x20] sm:$0xff]
          %v749 = vld [vmem:[#allocation2 + $0x28] sm:$0xff]
          %v750 = vld [vmem:[#allocation2 + $0x30] sm:$0xff]
          %v751 = vld [vmem:[#allocation2 + $0x38] sm:$0xff]
          %v752 = vld [vmem:[#allocation2 + $0x40] sm:$0xff]
          %v753 = vld [vmem:[#allocation2 + $0x48] sm:$0xff]
          %v754 = vld [vmem:[#allocation2 + $0x50] sm:$0xff]
          %v755 = vld [vmem:[#allocation2 + $0x58] sm:$0xff]
          %v756 = vld [vmem:[#allocation2 + $0x60] sm:$0xff]
          %v757 = vld [vmem:[#allocation2 + $0x68] sm:$0xff]
          %v758 = vld [vmem:[#allocation2 + $0x70] sm:$0xff]
          %v759 = vld [vmem:[#allocation2 + $0x78] sm:$0xff]
          %v760 = vld [vmem:[#allocation2 + $0x80] sm:$0xff]
          %v761 = vld [vmem:[#allocation2 + $0x88] sm:$0xff]
          %v762 = vld [vmem:[#allocation2 + $0x90] sm:$0xff]
          %v763 = vld [vmem:[#allocation2 + $0x98] sm:$0xff]
          %v764 = vld [vmem:[#allocation2 + $0xa0] sm:$0xff]
          %v765 = vld [vmem:[#allocation2 + $0xa8] sm:$0xff]
          %v766 = vld [vmem:[#allocation2 + $0xb0] sm:$0xff]
          %v767 = vld [vmem:[#allocation2 + $0xb8] sm:$0xff]
          %v768 = vld [vmem:[#allocation2 + $0xc0] sm:$0xff]
          %v769 = vld [vmem:[#allocation2 + $0xc8] sm:$0xff]
          %v770 = vld [vmem:[#allocation2 + $0xd0] sm:$0xff]
          %v771 = vld [vmem:[#allocation2 + $0xd8] sm:$0xff]
          %v772 = vld [vmem:[#allocation2 + $0xe0] sm:$0xff]
          %v773 = vld [vmem:[#allocation2 + $0xe8] sm:$0xff]
          %v774 = vld [vmem:[#allocation2 + $0xf0] sm:$0xff]
          %v775 = vld [vmem:[#allocation2 + $0xf8] sm:$0xff]
          %776 = vst [vmem:[%s244] sm:$0xff] %v744
          %777 = vst [vmem:[%s244 + $0x8] sm:$0xff] %v745
          %778 = vst [vmem:[%s244 + $0x10] sm:$0xff] %v746
          %779 = vst [vmem:[%s244 + $0x18] sm:$0xff] %v747
          %780 = vst [vmem:[%s244 + $0x20] sm:$0xff] %v748
          %781 = vst [vmem:[%s244 + $0x28] sm:$0xff] %v749
          %782 = vst [vmem:[%s244 + $0x30] sm:$0xff] %v750
          %783 = vst [vmem:[%s244 + $0x38] sm:$0xff] %v751
          %784 = vst [vmem:[%s244 + $0x40] sm:$0xff] %v752
          %785 = vst [vmem:[%s244 + $0x48] sm:$0xff] %v753
          %786 = vst [vmem:[%s244 + $0x50] sm:$0xff] %v754
          %787 = vst [vmem:[%s244 + $0x58] sm:$0xff] %v755
          %788 = vst [vmem:[%s244 + $0x60] sm:$0xff] %v756
          %789 = vst [vmem:[%s244 + $0x68] sm:$0xff] %v757
          %790 = vst [vmem:[%s244 + $0x70] sm:$0xff] %v758
          %791 = vst [vmem:[%s244 + $0x78] sm:$0xff] %v759
          %792 = vst [vmem:[%s244 + $0x80] sm:$0xff] %v760
          %793 = vst [vmem:[%s244 + $0x88] sm:$0xff] %v761
          %794 = vst [vmem:[%s244 + $0x90] sm:$0xff] %v762
          %795 = vst [vmem:[%s244 + $0x98] sm:$0xff] %v763
          %796 = vst [vmem:[%s244 + $0xa0] sm:$0xff] %v764
          %797 = vst [vmem:[%s244 + $0xa8] sm:$0xff] %v765
          %798 = vst [vmem:[%s244 + $0xb0] sm:$0xff] %v766
          %799 = vst [vmem:[%s244 + $0xb8] sm:$0xff] %v767
          %800 = vst [vmem:[%s244 + $0xc0] sm:$0xff] %v768
          %801 = vst [vmem:[%s244 + $0xc8] sm:$0xff] %v769
          %802 = vst [vmem:[%s244 + $0xd0] sm:$0xff] %v770
          %803 = vst [vmem:[%s244 + $0xd8] sm:$0xff] %v771
          %804 = vst [vmem:[%s244 + $0xe0] sm:$0xff] %v772
          %805 = vst [vmem:[%s244 + $0xe8] sm:$0xff] %v773
          %806 = vst [vmem:[%s244 + $0xf0] sm:$0xff] %v774
          %807 = vst [vmem:[%s244 + $0xf8] sm:$0xff] %v775
          %v808 = vadd.f32 %v744, %v745
          %v809 = vadd.f32 %v808, %v746
          %v810 = vadd.f32 %v809, %v747
          %v811 = vadd.f32 %v810, %v748
          %v812 = vadd.f32 %v811, %v749
          %v813 = vadd.f32 %v812, %v750
          %v814 = vadd.f32 %v813, %v751
          %v815 = vadd.f32 %v814, %v752
          %v816 = vadd.f32 %v815, %v753
          %v817 = vadd.f32 %v816, %v754
          %v818 = vadd.f32 %v817, %v755
          %v819 = vadd.f32 %v818, %v756
          %v820 = vadd.f32 %v819, %v757
          %v821 = vadd.f32 %v820, %v758
          %v822 = vadd.f32 %v821, %v759
          %v823 = vadd.f32 %v822, %v760
          %v824 = vadd.f32 %v823, %v761
          %v825 = vadd.f32 %v824, %v762
          %v826 = vadd.f32 %v825, %v763
          %v827 = vadd.f32 %v826, %v764
          %v828 = vadd.f32 %v827, %v765
          %v829 = vadd.f32 %v828, %v766
          %v830 = vadd.f32 %v829, %v767
          %v831 = vadd.f32 %v830, %v768
          %v832 = vadd.f32 %v831, %v769
          %v833 = vadd.f32 %v832, %v770
          %v834 = vadd.f32 %v833, %v771
          %v835 = vadd.f32 %v834, %v772
          %v836 = vadd.f32 %v835, %v773
          %v837 = vadd.f32 %v836, %v774
          %v838 = vadd.f32 %v837, %v775
          %v839 = vrot.slane %v838, 4
          %v840 = vadd.f32 %v838, %v839
          %v841 = vrot.slane %v840, 2
          %v842 = vadd.f32 %v840, %v841
          %v843 = vrot.slane %v842, 1
          %v844 = vadd.f32 %v842, %v843
          %845 = vst [vmem:[%s251] sm:$0x1] %v844
          %v846 = vmul.f32 %v744, %v744
          %v847 = vmul.f32 %v745, %v745
          %v848 = vmul.f32 %v746, %v746
          %v849 = vmul.f32 %v747, %v747
          %v850 = vmul.f32 %v748, %v748
          %v851 = vmul.f32 %v749, %v749
          %v852 = vmul.f32 %v750, %v750
          %v853 = vmul.f32 %v751, %v751
          %v854 = vmul.f32 %v752, %v752
          %v855 = vmul.f32 %v753, %v753
          %v856 = vmul.f32 %v754, %v754
          %v857 = vmul.f32 %v755, %v755
          %v858 = vmul.f32 %v756, %v756
          %v859 = vmul.f32 %v757, %v757
          %v860 = vmul.f32 %v758, %v758
          %v861 = vmul.f32 %v759, %v759
          %v862 = vmul.f32 %v760, %v760
          %v863 = vmul.f32 %v761, %v761
          %v864 = vmul.f32 %v762, %v762
          %v865 = vmul.f32 %v763, %v763
          %v866 = vmul.f32 %v764, %v764
          %v867 = vmul.f32 %v765, %v765
          %v868 = vmul.f32 %v766, %v766
          %v869 = vmul.f32 %v767, %v767
          %v870 = vmul.f32 %v768, %v768
          %v871 = vmul.f32 %v769, %v769
          %v872 = vmul.f32 %v770, %v770
          %v873 = vmul.f32 %v771, %v771
          %v874 = vmul.f32 %v772, %v772
          %v875 = vmul.f32 %v773, %v773
          %v876 = vmul.f32 %v774, %v774
          %v877 = vmul.f32 %v775, %v775
          %v878 = vadd.f32 %v846, %v847
          %v879 = vadd.f32 %v878, %v848
          %v880 = vadd.f32 %v879, %v849
          %v881 = vadd.f32 %v880, %v850
          %v882 = vadd.f32 %v881, %v851
          %v883 = vadd.f32 %v882, %v852
          %v884 = vadd.f32 %v883, %v853
          %v885 = vadd.f32 %v884, %v854
          %v886 = vadd.f32 %v885, %v855
          %v887 = vadd.f32 %v886, %v856
          %v888 = vadd.f32 %v887, %v857
          %v889 = vadd.f32 %v888, %v858
          %v890 = vadd.f32 %v889, %v859
          %v891 = vadd.f32 %v890, %v860
          %v892 = vadd.f32 %v891, %v861
          %v893 = vadd.f32 %v892, %v862
          %v894 = vadd.f32 %v893, %v863
          %v895 = vadd.f32 %v894, %v864
          %v896 = vadd.f32 %v895, %v865
          %v897 = vadd.f32 %v896, %v866
          %v898 = vadd.f32 %v897, %v867
          %v899 = vadd.f32 %v898, %v868
          %v900 = vadd.f32 %v899, %v869
          %v901 = vadd.f32 %v900, %v870
          %v902 = vadd.f32 %v901, %v871
          %v903 = vadd.f32 %v902, %v872
          %v904 = vadd.f32 %v903, %v873
          %v905 = vadd.f32 %v904, %v874
          %v906 = vadd.f32 %v905, %v875
          %v907 = vadd.f32 %v906, %v876
          %v908 = vadd.f32 %v907, %v877
          %v909 = vrot.slane %v908, 4
          %v910 = vadd.f32 %v908, %v909
          %v911 = vrot.slane %v910, 2
          %v912 = vadd.f32 %v910, %v911
          %v913 = vrot.slane %v912, 1
          %v914 = vadd.f32 %v912, %v913
          %915 = vst [vmem:[%s251 + $0x1] sm:$0x1] %v914
        $region44: #{tpu_custom_call.1} parent=27 // pred_fallthru
          _
        %s916 = sand.u32 %s110, 1
        %s917 = scalar_lea.sflag [#allocation5], %s916
        %s918 = sand.u32 %s110, 1
        %s919 = smul.addr %s918, 256
        %s920 = scalar_lea.vmem [#allocation8], %s919
        %s921 = sand.u32 %s138, 1
        %s922 = scalar_lea.sflag [#allocation10], %s921
        %s923 = sand.u32 %s138, 1
        %s924 = smul.addr %s923, 8
        %s925 = scalar_lea.vmem [#allocation9], %s924
        // Predicated region
        $region45: #{tpu_custom_call.1} parent=27 // pred_check
          %p926 = pneg %p120
        $region46: #{tpu_custom_call.1} parent=27 // pred_check_branch
          %928 = sbr.rel (%p926) target = $region48
        $region47: #{tpu_custom_call.1} parent=27 // pred_region
          %s929 = smul.u32 32, %s30
          %s931 = ssub.s32 4096, 4096
          %932 = vsyncadd %s917, %s931
          %s933 = sadd.s32 %s31, %s929
          %s934 = smul.addr %s933, 128
          %s935 = scalar_lea.hbm %s2, %s934
          %s936 = sshll.u32 %s920, 4
          %s937 = int_to_ptr.vmem [resolvable:$true] %s936
          %942 = dma.vmem_to_hbm [thread:$0]  %s937, 4096, %s935, %s917, 128, 128, 8
        $region48: #{tpu_custom_call.1} parent=27 // pred_fallthru
          _
        // Predicated region
        $region49: #{tpu_custom_call.1} parent=27 // pred_check
          %p943 = pneg %p148
        $region50: #{tpu_custom_call.1} parent=27 // pred_check_branch
          %945 = sbr.rel (%p943) target = $region52
        $region51: #{tpu_custom_call.1} parent=27 // pred_region
          %s947 = ssub.s32 128, 128
          %948 = vsyncadd %s922, %s947
          %s949 = sadd.s32 %s31, %s30
          %s950 = smul.addr %s949, 128
          %s951 = scalar_lea.hbm %s3, %s950
          %s953 = sshll.u32 %s925, 4
          %s954 = int_to_ptr.vmem [resolvable:$true] %s953
          %956 = dma.vmem_to_hbm [thread:$0]  %s954, 128, %s951, %s922
        $region52: #{tpu_custom_call.1} parent=27 // pred_fallthru
          _
      $region28: #{tpu_custom_call.1} parent=5 // pred_fallthru
        _
      %p957 = scmp.le.s32.totalorder 2, %s20
      // Predicated region
      $region53: #{tpu_custom_call.1} parent=5 // pred_check
        %p958 = pneg %p957
      $region54: #{tpu_custom_call.1} parent=5 // pred_check_branch
        %960 = sbr.rel (%p958) target = $region56
      $region55: #{tpu_custom_call.1} parent=5 // pred_region
        %s961 = ssub.s32 %s20, 2
        // Predicated region
        $region57: #{tpu_custom_call.1} parent=55 // pred_check
          %p962 = pneg %p126
        $region58: #{tpu_custom_call.1} parent=55 // pred_check_branch
          %964 = sbr.rel (%p962) target = $region60
        $region59: #{tpu_custom_call.1} parent=55 // pred_region
          %s965 = sand.u32 %s111, 1
          %s966 = scalar_lea.sflag [#allocation5], %s965
          %s967 = sand.u32 %s111, 1
          %s968 = smul.addr %s967, 256
          %s969 = scalar_lea.vmem [#allocation8], %s968
          %970 = dma.done %s966, 4096
        $region60: #{tpu_custom_call.1} parent=55 // pred_fallthru
          _
        // Predicated region
        $region61: #{tpu_custom_call.1} parent=55 // pred_check
          %p971 = pneg %p154
        $region62: #{tpu_custom_call.1} parent=55 // pred_check_branch
          %973 = sbr.rel (%p971) target = $region64
        $region63: #{tpu_custom_call.1} parent=55 // pred_region
          %s974 = sand.u32 %s139, 1
          %s975 = scalar_lea.sflag [#allocation10], %s974
          %s976 = sand.u32 %s139, 1
          %s977 = smul.addr %s976, 8
          %s978 = scalar_lea.vmem [#allocation9], %s977
          %979 = dma.done %s975, 128
        $region64: #{tpu_custom_call.1} parent=55 // pred_fallthru
          _
      $region56: #{tpu_custom_call.1} parent=5 // pred_fallthru
        _
    $region6: #{tpu_custom_call.1} parent=1 // loop_footer
      %s24 = sadd.s32 1, %s20
    $region7: #{tpu_custom_call.1} parent=1 // loop_footer_branch
      %19 = sbr.rel target = $region3
    $region8: #{tpu_custom_call.1} parent=1 // loop_exit
      _
    %980 = vsyncpa [#allocation4], 1
    %s981 = scalar_lea.sflag [#allocation4], 1
    %982 = vsyncpa %s981, 1
    %983 = vsyncpa [#allocation7], 1
    %984 = vsyncpa [#allocation5], 1
    %s985 = scalar_lea.sflag [#allocation5], 1
    %986 = vsyncpa %s985, 1
    %987 = vsyncpa [#allocation10], 1
    %s988 = scalar_lea.sflag [#allocation10], 1
    %989 = vsyncpa %s988, 1

</llo_original>
